<compile_context>
chip_gen: v5e
topology: v5e:2x2
jax: 0.10.0
libtpu: 0.0.40
codegen_flags: <defaults>
</compile_context>

<pallas_src>
import jax
import jax.numpy as jnp
from jax.experimental import pallas as pl
from jax.experimental.pallas import tpu as pltpu


def _round_up(x: int, m: int) -> int:
    return ((x + m - 1) // m) * m


def _mlp_kernel(x_ref, w1_ref, b1_ref, w2_ref, b2_ref, o_ref):
    # x_ref : (2E, TB) bf16   [user ; item] embeddings, batch on lanes
    # w1_ref: (Hp, 2E) bf16   fc1 weight (transposed), hidden on sublanes
    # b1_ref: (Hp, 1)  f32    fc1 bias (resident)
    # w2_ref: (Hp, 1)  f32    fc2 weight as a column (resident)
    # b2_ref: (1,)     f32    fc2 bias, SMEM scalar
    # o_ref : (1, TB)  f32    lane-dense output row
    h = jnp.dot(w1_ref[...], x_ref[...], preferred_element_type=jnp.float32)
    h = jnp.maximum(h + b1_ref[...], 0.0)                       # (Hp, TB) ReLU

    # fc2 has a single output unit: VPU multiply + sublane reduction straight
    # into the lane-dense (1, TB) row -- no relayout, no extra MXU pass.
    logits = jnp.sum(h * w2_ref[...], axis=0, keepdims=True) + b2_ref[0]
    y = jax.nn.sigmoid(logits)
    o_ref[...] = 4.0 * y + 1.0                                  # (1, TB)


def _choose_tiling(batch: int, tb_request: int) -> tuple[int, int]:
    """Pick (padded batch, batch tile). Batch lives on the lane axis."""
    if batch <= 256:
        # Tiny problem: one tile, full (8-aligned) batch as the lane extent.
        b_pad = _round_up(batch, 8)
        return b_pad, b_pad
    tb = _round_up(min(tb_request, 4096), 128)
    # Cap the tile so the grid has at least two steps -> both v7x TensorCores
    # get work; padding waste stays bounded by tb-1 rows.
    tb = min(tb, _round_up(pl.cdiv(_round_up(batch, 128), 2), 128))
    b_pad = _round_up(batch, tb)
    return b_pad, tb


def recommendation_nn_forward(user, item, params, *, tb: int = 2048):
    """Forward pass matching RecommendationNN.forward.

    user, item: int32 arrays of shape (B,)
    params: dict from prepare_params()
    returns float32 array of shape (B,)
    """
    twoE = params["w1_t"].shape[1]
    Hp = params["w1_t"].shape[0]
    B = user.shape[0]

    b_pad, tb = _choose_tiling(B, tb)
    pad = b_pad - B
    user_p = jnp.pad(user, (0, pad))   # id 0: valid rows, sliced off at the end
    item_p = jnp.pad(item, (0, pad))

    # Embedding gather + concat, directly in batch-on-lanes layout (2E, B_pad).
    # Tables are stored transposed (E, N) so no separate transpose is needed.
    x_t = jnp.concatenate(
        [
            jnp.take(params["user_emb_t"], user_p, axis=1),     # (E, B_pad)
            jnp.take(params["item_emb_t"], item_p, axis=1),     # (E, B_pad)
        ],
        axis=0,
    )                                                           # (2E, B_pad) bf16

    grid = (b_pad // tb,)

    out = pl.pallas_call(
        _mlp_kernel,
        out_shape=jax.ShapeDtypeStruct((1, b_pad), jnp.float32),
        grid=grid,
        in_specs=[
            pl.BlockSpec((twoE, tb), lambda i: (0, i)),         # activation tile
            pl.BlockSpec((Hp, twoE), lambda i: (0, 0)),         # W1^T (resident)
            pl.BlockSpec((Hp, 1), lambda i: (0, 0)),            # b1   (resident)
            pl.BlockSpec((Hp, 1), lambda i: (0, 0)),            # w2   (resident)
            pl.BlockSpec(memory_space=pltpu.MemorySpace.SMEM),  # b2 scalar
        ],
        out_specs=pl.BlockSpec((1, tb), lambda i: (0, i)),
        compiler_params=pltpu.CompilerParams(
            dimension_semantics=("parallel",),
            vmem_limit_bytes=48 * 1024 * 1024,
        ),
    )(
        x_t,
        params["w1_t"],
        params["b1"],
        params["w2"],
        params["b2"],
    )

    return out[0, :B]                                           # .view(-1)


def init_params(key, num_users, num_items, embedding_size, hidden_size):
    """Raw f32 params mimicking PyTorch defaults (N(0,1) embeddings,
    ~uniform(-1/sqrt(fan_in), 1/sqrt(fan_in)) linears). Linear weights are
    stored as (in_features, out_features), i.e. transposed vs torch."""
    k1, k2, k3, k4, k5, k6 = jax.random.split(key, 6)
    twoE = 2 * embedding_size
    lim1 = twoE ** -0.5
    lim2 = hidden_size ** -0.5
    return {
        "user_emb": jax.random.normal(k1, (num_users, embedding_size), jnp.float32),
        "item_emb": jax.random.normal(k2, (num_items, embedding_size), jnp.float32),
        "w1": jax.random.uniform(k3, (twoE, hidden_size), jnp.float32, -lim1, lim1),
        "b1": jax.random.uniform(k4, (hidden_size,), jnp.float32, -lim1, lim1),
        "w2": jax.random.uniform(k5, (hidden_size, 1), jnp.float32, -lim2, lim2),
        "b2": jax.random.uniform(k6, (1,), jnp.float32, -lim2, lim2),
    }


def prepare_params(raw, *, compute_dtype=jnp.bfloat16):
    """One-time host-side layout transform for the batch-on-lanes kernel:
    - embedding tables stored transposed (E, N) so the wrapper gather directly
      produces the (2E, B) activation,
    - fc1 weight stored as W1^T (Hp, 2E), hidden dim zero-padded to a multiple
      of 8 (sublane alignment); padded hidden units have zero weight/bias and
      zero fc2 weight, so they do not change the result,
    - embeddings + W1 cast to compute_dtype (bf16 by default; accepted
      quantization), biases / w2 stay f32."""
    E = raw["user_emb"].shape[1]
    H = raw["b1"].shape[0]
    Hp = _round_up(H, 8)
    pad_h = Hp - H

    w1_t = jnp.pad(raw["w1"].T, ((0, pad_h), (0, 0))).astype(compute_dtype)  # (Hp, 2E)
    b1 = jnp.pad(raw["b1"], (0, pad_h)).reshape(Hp, 1).astype(jnp.float32)
    w2 = jnp.pad(raw["w2"].reshape(-1), (0, pad_h)).reshape(Hp, 1).astype(jnp.float32)
    b2 = raw["b2"].reshape(1).astype(jnp.float32)

    return {
        "user_emb_t": raw["user_emb"].T.astype(compute_dtype),   # (E, num_users)
        "item_emb_t": raw["item_emb"].T.astype(compute_dtype),   # (E, num_items)
        "w1_t": w1_t,
        "b1": b1,
        "w2": w2,
        "b2": b2,
    }


if __name__ == "__main__":
    num_users, num_items = 10, 20
    embedding_size, hidden_size = 16, 32
    batch = 8

    key = jax.random.PRNGKey(0)
    pkey, ukey, ikey = jax.random.split(key, 3)
    raw = init_params(pkey, num_users, num_items, embedding_size, hidden_size)
    params = prepare_params(raw)

    user = jax.random.randint(ukey, (batch,), 0, num_users, dtype=jnp.int32)
    item = jax.random.randint(ikey, (batch,), 0, num_items, dtype=jnp.int32)

    out = recommendation_nn_forward(user, item, params)
    jax.block_until_ready(out)

    # Pure-JAX reference using the same (bf16-cast, padded) parameters so the
    # comparison isolates kernel correctness from the accepted quantization.
    x_t = jnp.concatenate(
        [params["user_emb_t"][:, user], params["item_emb_t"][:, item]], axis=0
    ).astype(jnp.float32)                                        # (2E, B)
    h = jnp.maximum(params["w1_t"].astype(jnp.float32) @ x_t + params["b1"], 0.0)
    logits = jnp.sum(h * params["w2"], axis=0) + params["b2"][0]  # (B,)
    ref = 4.0 * jax.nn.sigmoid(logits) + 1.0

    assert out.shape == (batch,)
    assert jnp.allclose(out, ref, atol=1e-3, rtol=1e-3), (out, ref)

    print("KERNEL_OK")
</pallas_src>

<mosaic_0001>
module attributes {stable_mosaic.version = 11 : i64} {
  func.func @_mlp_kernel(%arg0: i32, %arg1: memref<32x8xbf16, #tpu.memory_space<vmem>>, %arg2: memref<32x32xbf16, #tpu.memory_space<vmem>>, %arg3: memref<32x1xf32, #tpu.memory_space<vmem>>, %arg4: memref<32x1xf32, #tpu.memory_space<vmem>>, %arg5: memref<1xf32, #tpu.memory_space<smem>>, %arg6: memref<1x8xf32, #tpu.memory_space<vmem>>) attributes {dimension_semantics = [#tpu.dimension_semantics<parallel>], iteration_bounds = array<i64: 1>, scalar_prefetch = 0 : i64, scratch_operands = 0 : i64, tpu.core_type = #tpu.core_type<tc>, window_params = [{transform_indices = @transform_0, window_bounds = array<i64: 32, 8>}, {pipeline_mode = #tpu.pipeline_mode<synchronous>, transform_indices = @transform_1, window_bounds = array<i64: 32, 32>}, {pipeline_mode = #tpu.pipeline_mode<synchronous>, transform_indices = @transform_2, window_bounds = array<i64: 32, 1>}, {pipeline_mode = #tpu.pipeline_mode<synchronous>, transform_indices = @transform_3, window_bounds = array<i64: 32, 1>}, {transform_indices = @transform_4, window_bounds = array<i64: 1>}, {transform_indices = @transform_5, window_bounds = array<i64: 1, 8>}]} {
    %c0 = arith.constant 0 : index
    %c0_0 = arith.constant 0 : index
    %0 = vector.load %arg2[%c0, %c0_0] : memref<32x32xbf16, #tpu.memory_space<vmem>>, vector<32x32xbf16>
    %c0_1 = arith.constant 0 : index
    %c0_2 = arith.constant 0 : index
    %1 = vector.load %arg1[%c0_1, %c0_2] : memref<32x8xbf16, #tpu.memory_space<vmem>>, vector<32x8xbf16>
    %cst = arith.constant dense<0.000000e+00> : vector<32x8xf32>
    %2 = tpu.matmul %0, %1, %cst {dimension_numbers = #tpu.dot_dimension_numbers<[1], [0], [0], [1], [0, 0, 1, 1], [], []>} : vector<32x32xbf16>, vector<32x8xbf16>, vector<32x8xf32> -> vector<32x8xf32>
    %c0_3 = arith.constant 0 : index
    %c0_4 = arith.constant 0 : index
    %3 = vector.load %arg3[%c0_3, %c0_4] : memref<32x1xf32, #tpu.memory_space<vmem>>, vector<32x1xf32>
    %4 = vector.broadcast %3 : vector<32x1xf32> to vector<32x8xf32>
    %5 = arith.addf %2, %4 : vector<32x8xf32>
    %cst_5 = arith.constant 0.000000e+00 : f32
    %6 = vector.broadcast %cst_5 : f32 to vector<32x8xf32>
    %7 = arith.maximumf %5, %6 : vector<32x8xf32>
    %c0_6 = arith.constant 0 : index
    %c0_7 = arith.constant 0 : index
    %8 = vector.load %arg4[%c0_6, %c0_7] : memref<32x1xf32, #tpu.memory_space<vmem>>, vector<32x1xf32>
    %9 = vector.broadcast %8 : vector<32x1xf32> to vector<32x8xf32>
    %10 = arith.mulf %7, %9 : vector<32x8xf32>
    %cst_8 = arith.constant dense<0.000000e+00> : vector<8xf32>
    %11 = vector.multi_reduction <add>, %10, %cst_8 [0] : vector<32x8xf32> to vector<8xf32>
    %12 = vector.shape_cast %11 : vector<8xf32> to vector<1x8xf32>
    %c0_9 = arith.constant 0 : index
    %13 = memref.load %arg5[%c0_9] : memref<1xf32, #tpu.memory_space<smem>>
    %14 = vector.broadcast %13 : f32 to vector<1x8xf32>
    %15 = arith.addf %12, %14 : vector<1x8xf32>
    %16 = arith.negf %15 : vector<1x8xf32>
    %17 = math.exp %16 : vector<1x8xf32>
    %cst_10 = arith.constant 1.000000e+00 : f32
    %18 = vector.broadcast %cst_10 : f32 to vector<1x8xf32>
    %19 = arith.addf %18, %17 : vector<1x8xf32>
    %20 = arith.divf %18, %19 : vector<1x8xf32>
    %cst_11 = arith.constant 4.000000e+00 : f32
    %21 = vector.broadcast %cst_11 : f32 to vector<1x8xf32>
    %22 = arith.mulf %21, %20 : vector<1x8xf32>
    %cst_12 = arith.constant 1.000000e+00 : f32
    %23 = vector.broadcast %cst_12 : f32 to vector<1x8xf32>
    %24 = arith.addf %22, %23 : vector<1x8xf32>
    %c0_13 = arith.constant 0 : index
    %c0_14 = arith.constant 0 : index
    %25 = vector.load %arg6[%c0_13, %c0_14] : memref<1x8xf32, #tpu.memory_space<vmem>>, vector<1x8xf32>
    tpu.vector_store %arg6[%c0_13, %c0_14], %24 {strides = array<i32>} : memref<1x8xf32, #tpu.memory_space<vmem>>, vector<1x8xf32>,
    return
  }
  func.func @transform_0(%arg0: i32) -> (i32, i32) {
    %c0_i32 = arith.constant 0 : i32
    %c0_i32_0 = arith.constant 0 : i32
    return %c0_i32, %arg0 : i32, i32
  }
  func.func @transform_1(%arg0: i32) -> (i32, i32) {
    %c0_i32 = arith.constant 0 : i32
    %c0_i32_0 = arith.constant 0 : i32
    %c0_i32_1 = arith.constant 0 : i32
    return %c0_i32, %c0_i32_0 : i32, i32
  }
  func.func @transform_2(%arg0: i32) -> (i32, i32) {
    %c0_i32 = arith.constant 0 : i32
    %c0_i32_0 = arith.constant 0 : i32
    %c0_i32_1 = arith.constant 0 : i32
    return %c0_i32, %c0_i32_0 : i32, i32
  }
  func.func @transform_3(%arg0: i32) -> (i32, i32) {
    %c0_i32 = arith.constant 0 : i32
    %c0_i32_0 = arith.constant 0 : i32
    %c0_i32_1 = arith.constant 0 : i32
    return %c0_i32, %c0_i32_0 : i32, i32
  }
  func.func @transform_4(%arg0: i32) -> i32 {
    %c0_i32 = arith.constant 0 : i32
    %c0_i32_0 = arith.constant 0 : i32
    return %c0_i32 : i32
  }
  func.func @transform_5(%arg0: i32) -> (i32, i32) {
    %c0_i32 = arith.constant 0 : i32
    %c0_i32_0 = arith.constant 0 : i32
    return %c0_i32, %arg0 : i32, i32
  }
}

</mosaic_0001>

<llo_original>
// kernel: tpu_custom_call.1
$region0: #{tpu_custom_call.1}
  #allocation0 [shape = 'u32[]', space=smem, size = 0x4, offset = 0x4, fixed_abs, tag = 'smem constant byte address 0x4 - core index']
  #allocation1 [shape = 'u32[72,128]{1,0:T(1,128)}', space=vmem, size = 0x9000, scoped, tag = 'internal scratch']
  #allocation2 [shape = 'f32[1]{0:T(128)S(6)}', space=smem, size = 0x200, scoped, tag = 'scoped memory for tpu_custom_call.1']
  %s0 = inlined_call_operand.vmem [shape: bf16[32,8], index: 0, kind: input, shape index: {}]
  %s1 = inlined_call_operand.vmem [shape: bf16[32,32], index: 1, kind: input, shape index: {}]
  %s2 = inlined_call_operand.vmem [shape: f32[32,1], index: 2, kind: input, shape index: {}]
  %s3 = inlined_call_operand.vmem [shape: f32[32,1], index: 3, kind: input, shape index: {}]
  %s4 = inlined_call_operand.<no memory space> [shape: f32[1], index: 4, kind: input, shape index: {}]
  %s5 = inlined_call_operand.hbm [shape: f32[1,8], index: 5, kind: output, shape index: {}]
  %s6 = sld [smem:[#allocation0]]
  $region30: #{tpu_custom_call.1} parent=0
    _
  %s8 = ssub.s32 1, %s6
  %s9 = scalar_select 0, %s8, %s6
  %10 = sst [smem:[#allocation2]] %s4
  $region1: #{tpu_custom_call.1} parent=0
    #allocation3 [shape = 'u8[512]{0}', space=vmem, size = 0x400, scoped, tag = 'output window, operand 0, single buffered']
    #allocation4 [shape = 's32[1]{0}', space=sflag, size = 0x4, scoped, tag = 'scoped memory for tpu_custom_call.1']
    %11 = vsyncpa [#allocation4], 0
    // Predicated region
    $region2: #{tpu_custom_call.1} parent=1 // pred_check
      _
    $region3: #{tpu_custom_call.1} parent=1 // pred_check_branch
      %13 = sbr.rel (0) target = $region5
    $region4: #{tpu_custom_call.1} parent=1 // pred_region
      _
    $region5: #{tpu_custom_call.1} parent=1 // pred_fallthru
      _
    // Predicated region
    $region6: #{tpu_custom_call.1} parent=1 // pred_check
      _
    $region7: #{tpu_custom_call.1} parent=1 // pred_check_branch
      %15 = sbr.rel (0) target = $region9
    $region8: #{tpu_custom_call.1} parent=1 // pred_region
      _
    $region9: #{tpu_custom_call.1} parent=1 // pred_fallthru
      _
    // Predicated region
    $region10: #{tpu_custom_call.1} parent=1 // pred_check
      _
    $region11: #{tpu_custom_call.1} parent=1 // pred_check_branch
      %17 = sbr.rel (0) target = $region13
    $region12: #{tpu_custom_call.1} parent=1 // pred_region
      _
    $region13: #{tpu_custom_call.1} parent=1 // pred_fallthru
      _
    // Predicated region
    $region14: #{tpu_custom_call.1} parent=1 // pred_check
      _
    $region15: #{tpu_custom_call.1} parent=1 // pred_check_branch
      %19 = sbr.rel (0) target = $region17
    $region16: #{tpu_custom_call.1} parent=1 // pred_region
      _
    $region17: #{tpu_custom_call.1} parent=1 // pred_fallthru
      _
    // Predicated region
    $region18: #{tpu_custom_call.1} parent=1 // pred_check
      _
    $region19: #{tpu_custom_call.1} parent=1 // pred_check_branch
      %21 = sbr.rel (0) target = $region21
    $region20: #{tpu_custom_call.1} parent=1 // pred_region
      _
    $region21: #{tpu_custom_call.1} parent=1 // pred_fallthru
      _
    %v23 = vld [vmem:[%s1] sm:$0xf]
    %v24 = vld [vmem:[%s1 + $0x4] sm:$0xf]
    %v25 = vld [vmem:[%s1 + $0x8] sm:$0xf]
    %v26 = vld [vmem:[%s1 + $0xc] sm:$0xf]
    %v27 = vld [vmem:[%s0] sm:$0xf]
    %v28 = vld [vmem:[%s0 + $0x4] sm:$0xf]
    %v29 = vld [vmem:[%s0 + $0x8] sm:$0xf]
    %v30 = vld [vmem:[%s0 + $0xc] sm:$0xf]
    %v31 = vld [vmem:[%s2] sm:$0xff]
    %v32 = vld [vmem:[%s2 + $0x8] sm:$0xff]
    %v33 = vld [vmem:[%s2 + $0x10] sm:$0xff]
    %v34 = vld [vmem:[%s2 + $0x18] sm:$0xff]
    %36 = vset.pattern.permute.xlu0 0
    %37 = vperm.xlu0 %36, %v31
    %v38 = vpop.permute.xlu0 %37
    %41 = vset.pattern.permute.xlu0 0
    %42 = vperm.xlu0 %41, %v32
    %v43 = vpop.permute.xlu0 %42
    %46 = vset.pattern.permute.xlu0 0
    %47 = vperm.xlu0 %46, %v33
    %v48 = vpop.permute.xlu0 %47
    %51 = vset.pattern.permute.xlu0 0
    %52 = vperm.xlu0 %51, %v34
    %v53 = vpop.permute.xlu0 %52
    %v59 = vunpack.c.l.b16 %v23
    %v60 = vunpack.c.l.b16 %v24
    %v61 = vunpack.c.l.b16 %v25
    %v62 = vunpack.c.l.b16 %v26
    %v63 = vpack.c.b16 %v60, %v59
    %v64 = vpack.c.b16 %v62, %v61
    %v69 = vunpack.c.l.b16 %v27
    %v70 = vunpack.c.l.b16 %v28
    %v71 = vunpack.c.l.b16 %v29
    %v72 = vunpack.c.l.b16 %v30
    %v73 = vpack.c.b16 %v70, %v69
    %v74 = vpack.c.b16 %v72, %v71
    %vm77 = vcmask 261120
    %v79 = vsel %vm77, %v63, 0
    %v82 = vsel %vm77, %v64, 0
    %84 = vmatpush.bf16.msra.mxu0 0
    %85 = vmatpush.bf16.msra.mxu0 0
    %86 = vmatpush.bf16.msra.mxu0 0
    %87 = vmatpush.bf16.msra.mxu0 0
    %88 = vmatpush.bf16.msra.mxu0 0
    %89 = vmatpush.bf16.msra.mxu0 0
    %90 = vmatpush.bf16.msra.mxu0 %v74
    %91 = vmatpush.bf16.msra.mxu0 %v73
    %92 = vmatmul.bf16.gmra.mxu0 %v79
    %v93 = vpop.f32.mrf.mxu0
    %v94 = vadd.f32 %v38, %v93
    %v95 = vpop.f32.mrf.mxu0
    %v96 = vadd.f32 %v43, %v95
    %97 = vmatmul.bf16.gmra.mxu0 %v82
    %v98 = vpop.f32.mrf.mxu0
    %v99 = vadd.f32 %v48, %v98
    %v100 = vpop.f32.mrf.mxu0
    %v101 = vadd.f32 %v53, %v100
    %102 = vdwg.mxu0
    %v103 = vmax.f32 %v94, 0.0
    %v104 = vmax.f32 %v96, 0.0
    %v105 = vmax.f32 %v99, 0.0
    %v106 = vmax.f32 %v101, 0.0
    %v107 = vld [vmem:[%s3] sm:$0xff]
    %v108 = vld [vmem:[%s3 + $0x8] sm:$0xff]
    %v109 = vld [vmem:[%s3 + $0x10] sm:$0xff]
    %v110 = vld [vmem:[%s3 + $0x18] sm:$0xff]
    %112 = vset.pattern.permute.xlu0 0
    %113 = vperm.xlu0 %112, %v107
    %v114 = vpop.permute.xlu0 %113
    %117 = vset.pattern.permute.xlu0 0
    %118 = vperm.xlu0 %117, %v108
    %v119 = vpop.permute.xlu0 %118
    %122 = vset.pattern.permute.xlu0 0
    %123 = vperm.xlu0 %122, %v109
    %v124 = vpop.permute.xlu0 %123
    %127 = vset.pattern.permute.xlu0 0
    %128 = vperm.xlu0 %127, %v110
    %v129 = vpop.permute.xlu0 %128
    %v131 = vmul.f32 %v103, %v114
    %v132 = vmul.f32 %v104, %v119
    %v133 = vmul.f32 %v105, %v124
    %v134 = vmul.f32 %v106, %v129
    %vm135 = vcmask 64512
    %v136 = vsel %vm135, %v131, 0.0
    %v137 = vsel %vm135, %v132, 0.0
    %v138 = vadd.f32 %v136, %v137
    %v139 = vsel %vm135, %v133, 0.0
    %v140 = vadd.f32 %v138, %v139
    %v141 = vsel %vm135, %v134, 0.0
    %v142 = vadd.f32 %v140, %v141
    %v143 = vrot.slane %v142, 4
    %v144 = vadd.f32 %v142, %v143
    %v145 = vrot.slane %v144, 2
    %v146 = vadd.f32 %v144, %v145
    %v147 = vrot.slane %v146, 1
    %v148 = vadd.f32 %v146, %v147
    %s149 = sld [smem:[#allocation2]]
    %v150 = vstv %s149
    %v151 = vadd.f32 %v148, %v150
    %v152 = vxor.u32 %v151, 2147483648
    %v153 = vmul.f32 %v152, 1.442695
    %v154 = vpow.pop %v153
    %v155 = vadd.f32 %v154, 1.0
    %v156 = vrcp.pop %v155
    %v157 = vmul.f32 %v155, %v156
    %v158 = vsub.f32 1.0, %v157
    %v159 = vmul.f32 %v156, %v158
    %v160 = vadd.f32 %v156, %v159
    %vm161 = vweird.f32 %v155
    %vm162 = vweird.f32 %v156
    %vm163 = vmor %vm161, %vm162
    %v164 = vsel %vm163, %v156, %v160
    %v165 = vand.u32 2147483647, %v155
    %vm166 = vcmp.eq.f32.partialorder %v165, 8.507059e+37
    %v167 = vand.u32 %v155, 2147483648
    %v168 = vor.u32 1.1754944e-38, %v167
    %v169 = vsel %vm166, %v168, %v164
    %v170 = vmul.f32 1.0, %v169
    %v171 = vmul.f32 %v170, 4.0
    %v172 = vadd.f32 %v171, 1.0
    %vm173 = vcmask 57344
    %174 = vst.msk [vmem:[#allocation3] sm:$0x1] %vm173, %v172
    // Predicated region
    $region22: #{tpu_custom_call.1} parent=1 // pred_check
      _
    $region23: #{tpu_custom_call.1} parent=1 // pred_check_branch
      %176 = sbr.rel (0) target = $region25
    $region24: #{tpu_custom_call.1} parent=1 // pred_region
      %178 = vsyncadd [#allocation4], 0
      %s180 = sshll.u32 [#allocation3], 4
      %s181 = int_to_ptr.vmem [resolvable:$true] %s180
      %s182 = sshll.u32 %s5, 4
      %s183 = int_to_ptr.hbm [resolvable:$true] %s182
      %185 = dma.vmem_to_hbm [thread:$0]  %s181, 16, %s183, [#allocation4]
    $region25: #{tpu_custom_call.1} parent=1 // pred_fallthru
      _
    // Predicated region
    $region26: #{tpu_custom_call.1} parent=1 // pred_check
      _
    $region27: #{tpu_custom_call.1} parent=1 // pred_check_branch
      %187 = sbr.rel (0) target = $region29
    $region28: #{tpu_custom_call.1} parent=1 // pred_region
      %189 = dma.done [#allocation4], 16
    $region29: #{tpu_custom_call.1} parent=1 // pred_fallthru
      _
    %190 = vsyncpa [#allocation4], 1

</llo_original>
